<compile_context>
chip_gen: v5e
topology: v5e:2x2
jax: 0.10.0
libtpu: 0.0.40
codegen_flags: <defaults>
</compile_context>

<pallas_src>
import jax
import jax.numpy as jnp
from jax.experimental import pallas as pl
from jax.experimental.pallas import tpu as pltpu


def _gather_project_kernel(ids_ref, table_hbm, w_ref, out_ref, emb_buf, sem):
    # ids_ref   : (n_pad,) int32   SMEM (scalar prefetch)
    # table_hbm : (V, D)   float32 HBM (pl.ANY) -- gathered row-by-row via DMA
    # w_ref     : (D, Hp)  bf16    VMEM (constant block index)
    # out_ref   : (TM, Hp) f32     VMEM output tile
    # emb_buf   : (TM, D)  f32     VMEM scratch (gather destination)
    # sem       : scalar DMA semaphore shared by the TM equal-sized row copies
    tm = out_ref.shape[0]
    base = pl.program_id(0) * tm

    # 1) Issue TM independent row-gather DMAs: HBM table row -> VMEM scratch row.
    @pl.loop(0, tm)
    def _issue(r):
        tok = ids_ref[base + r]
        pltpu.make_async_copy(table_hbm.at[tok], emb_buf.at[r], sem).start()

    # 2) Wait for all of them.  All copies are the same size and share one
    #    semaphore, so one wait per issued copy drains it exactly.
    @pl.loop(0, tm)
    def _wait(r):
        pltpu.make_async_copy(table_hbm.at[0], emb_buf.at[r], sem).wait()

    # 3) F.dropout(training=False) is the identity.
    # TODO(synk): training-mode dropout mask (pltpu.prng_seed + prng_random_bits)
    #             is not emitted; the wrapper rejects training=True.

    # 4) Projection on the MXU: (TM, D) @ (D, Hp), bf16 inputs, f32 accumulation.
    emb = emb_buf[...].astype(jnp.bfloat16)
    out_ref[...] = jnp.dot(
        emb, w_ref[...], preferred_element_type=jnp.float32
    ).astype(out_ref.dtype)


def embedding_forward(x, word_vectors, proj_weight, *, drop_prob=0.1,
                      training=False, tm=128):
    """Forward pass of the logiqa Embedding module.

    x            : (B, S) int token ids
    word_vectors : (V, D) float32 embedding table
    proj_weight  : (H, D) float32 (PyTorch nn.Linear weight layout, no bias)
    returns      : (B, S, H) float32
    """
    if training and drop_prob > 0.0:
        # TODO(synk): implement training-mode dropout instead of raising.
        raise NotImplementedError("training-mode dropout is not implemented")

    B, S = x.shape
    V, D = word_vectors.shape
    H = proj_weight.shape[0]

    n = B * S
    n_pad = tm * pl.cdiv(n, tm)
    Hp = 128 * pl.cdiv(H, 128)          # lane-dense output feature dim

    # Clamp ids (PyTorch would error on OOB; we refuse to DMA out of bounds),
    # flatten and pad the token stream to a multiple of the tile size.
    ids = jnp.clip(x.reshape(-1).astype(jnp.int32), 0, V - 1)
    ids = jnp.pad(ids, (0, n_pad - n))  # pad tokens -> row 0; sliced off below

    table_f32 = word_vectors.astype(jnp.float32)            # stays in HBM
    w_t = jnp.pad(proj_weight.T.astype(jnp.bfloat16),        # (D, Hp) bf16
                  ((0, 0), (0, Hp - H)))

    out = pl.pallas_call(
        _gather_project_kernel,
        out_shape=jax.ShapeDtypeStruct((n_pad, Hp), jnp.float32),
        grid_spec=pltpu.PrefetchScalarGridSpec(
            num_scalar_prefetch=1,
            grid=(n_pad // tm,),
            in_specs=[
                pl.BlockSpec(memory_space=pl.ANY),             # (V, D) table, HBM
                pl.BlockSpec((D, Hp), lambda i, ids: (0, 0)),  # projection weight
            ],
            out_specs=pl.BlockSpec((tm, Hp), lambda i, ids: (i, 0)),
            scratch_shapes=[
                pltpu.VMEM((tm, D), jnp.float32),   # gathered embedding rows
                pltpu.SemaphoreType.DMA(()),        # shared gather semaphore
            ],
        ),
        compiler_params=pltpu.CompilerParams(
            dimension_semantics=("parallel",),
            vmem_limit_bytes=32 * 1024 * 1024,
        ),
        cost_estimate=pl.CostEstimate(
            flops=2 * n_pad * D * Hp,
            transcendentals=0,
            bytes_accessed=(n_pad * 4            # ids
                            + n_pad * D * 4      # gathered table rows
                            + D * Hp * 2         # bf16 weight
                            + n_pad * Hp * 4),   # output
        ),
    )(ids, table_f32, w_t)

    return out[:n, :H].reshape(B, S, H)


if __name__ == "__main__":
    # Small, deterministic synthetic shapes.
    B, S = 2, 8          # batch, sequence length
    V, D = 32, 16        # vocab size, word-vector dim
    H = 32               # hidden size

    key = jax.random.PRNGKey(0)
    k_wv, k_proj, k_ids = jax.random.split(key, 3)

    word_vectors = jax.random.normal(k_wv, (V, D), dtype=jnp.float32)
    proj_weight = jax.random.normal(k_proj, (H, D), dtype=jnp.float32) * 0.1
    x = jax.random.randint(k_ids, (B, S), 0, V, dtype=jnp.int32)

    out = embedding_forward(x, word_vectors, proj_weight,
                            drop_prob=0.1, training=False)
    out = jax.block_until_ready(out)

    # Reference check in plain JAX (f32); kernel runs the matmul in bf16 on the
    # MXU with f32 accumulation, so use a bf16-appropriate tolerance.
    ref = word_vectors[x] @ proj_weight.T
    assert out.shape == (B, S, H), out.shape
    assert jnp.allclose(out, ref, atol=2e-2, rtol=2e-2), "mismatch vs reference"

    print("KERNEL_OK")
</pallas_src>

<mosaic_0001>
module attributes {stable_mosaic.version = 11 : i64} {
  func.func @_gather_project_kernel(%arg0: i32, %arg1: memref<128xi32, #tpu.memory_space<smem>>, %arg2: memref<32x16xf32, #tpu.memory_space<any>>, %arg3: memref<16x128xbf16, #tpu.memory_space<vmem>>, %arg4: memref<128x128xf32, #tpu.memory_space<vmem>>, %arg5: memref<128x16xf32, #tpu.memory_space<vmem>>, %arg6: memref<!tpu.dma_semaphore, #tpu.memory_space<semaphore_mem>>) attributes {dimension_semantics = [#tpu.dimension_semantics<parallel>], iteration_bounds = array<i64: 1>, scalar_prefetch = 1 : i64, scratch_operands = 2 : i64, tpu.core_type = #tpu.core_type<tc>, window_params = [{}, {pipeline_mode = #tpu.pipeline_mode<synchronous>, transform_indices = @transform_1, window_bounds = array<i64: 16, 128>}, {transform_indices = @transform_2, window_bounds = array<i64: 128, 128>}]} {
    %c128_i32 = arith.constant 128 : i32
    %0 = arith.muli %arg0, %c128_i32 : i32
    %c0_i32 = arith.constant 0 : i32
    %c128_i32_0 = arith.constant 128 : i32
    %1 = arith.addi %c0_i32, %c128_i32_0 : i32
    %c1_i32 = arith.constant 1 : i32
    scf.for %arg7 = %c0_i32 to %1 step %c1_i32  : i32 {
      %c1_i32_11 = arith.constant 1 : i32
      %8 = arith.muli %arg7, %c1_i32_11 : i32
      %c0_i32_12 = arith.constant 0 : i32
      %9 = arith.addi %c0_i32_12, %8 : i32
      %10 = arith.addi %0, %9 : i32
      %11 = arith.index_cast %10 : i32 to index
      %12 = memref.load %arg1[%11] : memref<128xi32, #tpu.memory_space<smem>>
      %c0_i32_13 = arith.constant 0 : i32
      %13 = tpu.memref_slice %arg2[%12, %c0_i32_13] : memref<32x16xf32, #tpu.memory_space<any>> -> memref<1x16xf32, #tpu.memory_space<any>>
      %14 = tpu.memref_squeeze %13 : memref<1x16xf32, #tpu.memory_space<any>> -> memref<16xf32, #tpu.memory_space<any>>
      %c0_i32_14 = arith.constant 0 : i32
      %15 = tpu.memref_slice %arg5[%9, %c0_i32_14] : memref<128x16xf32, #tpu.memory_space<vmem>> -> memref<1x16xf32, #tpu.memory_space<vmem>>
      %16 = tpu.memref_squeeze %15 : memref<1x16xf32, #tpu.memory_space<vmem>> -> memref<16xf32, #tpu.memory_space<vmem>>
      tpu.enqueue_dma source(%14 : memref<16xf32, #tpu.memory_space<any>>) target(%16 : memref<16xf32, #tpu.memory_space<vmem>>) target_semaphore(%arg6 : memref<!tpu.dma_semaphore, #tpu.memory_space<semaphore_mem>>)
    }
    %c128_i32_1 = arith.constant 128 : i32
    %c0_i32_2 = arith.constant 0 : i32
    %c128_i32_3 = arith.constant 128 : i32
    %2 = arith.addi %c0_i32_2, %c128_i32_3 : i32
    %c1_i32_4 = arith.constant 1 : i32
    scf.for %arg7 = %c0_i32_2 to %2 step %c1_i32_4  : i32 {
      %c1_i32_11 = arith.constant 1 : i32
      %8 = arith.muli %arg7, %c1_i32_11 : i32
      %c0_i32_12 = arith.constant 0 : i32
      %9 = arith.addi %c0_i32_12, %8 : i32
      %c0_i32_13 = arith.constant 0 : i32
      %c0_i32_14 = arith.constant 0 : i32
      %10 = tpu.memref_slice %arg2[%c0_i32_13, %c0_i32_14] : memref<32x16xf32, #tpu.memory_space<any>> -> memref<1x16xf32, #tpu.memory_space<any>>
      %11 = tpu.memref_squeeze %10 : memref<1x16xf32, #tpu.memory_space<any>> -> memref<16xf32, #tpu.memory_space<any>>
      %c0_i32_15 = arith.constant 0 : i32
      %12 = tpu.memref_slice %arg5[%9, %c0_i32_15] : memref<128x16xf32, #tpu.memory_space<vmem>> -> memref<1x16xf32, #tpu.memory_space<vmem>>
      %13 = tpu.memref_squeeze %12 : memref<1x16xf32, #tpu.memory_space<vmem>> -> memref<16xf32, #tpu.memory_space<vmem>>
      tpu.wait_dma2 semaphore(%arg6 : memref<!tpu.dma_semaphore, #tpu.memory_space<semaphore_mem>>) src(%11 : memref<16xf32, #tpu.memory_space<any>>) dst(%13 : memref<16xf32, #tpu.memory_space<vmem>>)
    }
    %c128_i32_5 = arith.constant 128 : i32
    %c0 = arith.constant 0 : index
    %c0_6 = arith.constant 0 : index
    %3 = vector.load %arg5[%c0, %c0_6] : memref<128x16xf32, #tpu.memory_space<vmem>>, vector<128x16xf32>
    %4 = arith.truncf %3 : vector<128x16xf32> to vector<128x16xbf16>
    %c0_7 = arith.constant 0 : index
    %c0_8 = arith.constant 0 : index
    %5 = vector.load %arg3[%c0_7, %c0_8] : memref<16x128xbf16, #tpu.memory_space<vmem>>, vector<16x128xbf16>
    %cst = arith.constant dense<0.000000e+00> : vector<128x128xf32>
    %6 = tpu.matmul %4, %5, %cst {dimension_numbers = #tpu.dot_dimension_numbers<[1], [0], [0], [1], [0, 0, 1, 1], [], []>} : vector<128x16xbf16>, vector<16x128xbf16>, vector<128x128xf32> -> vector<128x128xf32>
    %c0_9 = arith.constant 0 : index
    %c0_10 = arith.constant 0 : index
    %7 = vector.load %arg4[%c0_9, %c0_10] : memref<128x128xf32, #tpu.memory_space<vmem>>, vector<128x128xf32>
    tpu.vector_store %arg4[%c0_9, %c0_10], %6 {strides = array<i32>} : memref<128x128xf32, #tpu.memory_space<vmem>>, vector<128x128xf32>,
    return
  }
  func.func @transform_1(%arg0: i32, %arg1: memref<128xi32, #tpu.memory_space<smem>>) -> (i32, i32) {
    %c0_i32 = arith.constant 0 : i32
    %c0_i32_0 = arith.constant 0 : i32
    %c0_i32_1 = arith.constant 0 : i32
    return %c0_i32, %c0_i32_0 : i32, i32
  }
  func.func @transform_2(%arg0: i32, %arg1: memref<128xi32, #tpu.memory_space<smem>>) -> (i32, i32) {
    %c0_i32 = arith.constant 0 : i32
    %c0_i32_0 = arith.constant 0 : i32
    return %arg0, %c0_i32 : i32, i32
  }
}

</mosaic_0001>

<llo_original>
// kernel: tpu_custom_call.1
$region0: #{tpu_custom_call.1}
  #allocation0 [shape = 'u32[]', space=smem, size = 0x4, offset = 0x4, fixed_abs, tag = 'smem constant byte address 0x4 - core index']
  #allocation1 [shape = 'u32[72,128]{1,0:T(1,128)}', space=vmem, size = 0x9000, scoped, tag = 'internal scratch']
  #allocation2 [shape = 'f32[128,16]{1,0:T(8,128)}', space=vmem, size = 0x10000, scoped, tag = 'scratch operand']
  #allocation3 [shape = 's32[1]{0}', space=sflag, size = 0x4, scoped, tag = 'scratch operand']
  #allocation4 [shape = 's32[1]{0}', space=sflag, size = 0x4, scoped, tag = 'scoped memory for tpu_custom_call.1']
  #allocation5 [shape = 'u8[512]{0}', space=smem, size = 0x200, scoped, tag = 'prefetched SMEM operand 0']
  #allocation8 [shape = 's32[]', space=sflag, size = 0x4, offset = 0, fixed_abs, tag = 'sflag constant byte address 0x0 - dummy sync flag']
  %s0 = inlined_call_operand.vmem [shape: s32[128], index: 0, kind: input, shape index: {}]
  %s1 = inlined_call_operand.vmem [shape: f32[32,16], index: 1, kind: input, shape index: {}]
  %s2 = inlined_call_operand.vmem [shape: bf16[16,128], index: 2, kind: input, shape index: {}]
  %s3 = inlined_call_operand.hbm [shape: f32[128,128], index: 3, kind: output, shape index: {}]
  %s4 = sld [smem:[#allocation0]]
  $region58: #{tpu_custom_call.1} parent=0
    _
  %s6 = ssub.s32 1, %s4
  %s7 = scalar_select 0, %s6, %s4
  %s9 = sshll.u32 %s0, 4
  %s10 = int_to_ptr.vmem [resolvable:$true] %s9
  %12 = dma.vmem_to_smem %s10, 16, [#allocation5], [#allocation4]
  %14 = dma.done [#allocation4], 16
  %15 = sfence
  $region1: #{tpu_custom_call.1} parent=0
    #allocation6 [shape = 'u8[65536]{0}', space=vmem, size = 0x10000, scoped, tag = 'output window, operand 0, single buffered']
    #allocation7 [shape = 's32[1]{0}', space=sflag, size = 0x4, scoped, tag = 'scoped memory for tpu_custom_call.1']
    %16 = vsyncpa [#allocation7], 0
    // Predicated region
    $region2: #{tpu_custom_call.1} parent=1 // pred_check
      _
    $region3: #{tpu_custom_call.1} parent=1 // pred_check_branch
      %18 = sbr.rel (0) target = $region5
    $region4: #{tpu_custom_call.1} parent=1 // pred_region
      _
    $region5: #{tpu_custom_call.1} parent=1 // pred_fallthru
      _
    %s20 = smul.u32 0, 128
    loop: start=0, step=1, limit=128
    $region6: #{tpu_custom_call.1} parent=1 // loop_pre_header
      _
    $region7: #{tpu_custom_call.1} parent=1 // loop_header
      %s22 = sphi 0, %s26
      %p23 = scmp.ge.s32.totalorder %s22, 128
    $region8: #{tpu_custom_call.1} parent=1 // loop_header_branch
      %25 = sbr.rel (%p23) target = $region12
    $region9: #{tpu_custom_call.1} parent=1 // loop_body
      %s27 = sadd.s32 %s20, %s22
      %s28 = sld [smem:[#allocation5 + %s27]]
      %s29 = scalar_lea.vmem %s1, %s28
      %s30 = scalar_lea.vmem [#allocation2], %s22
      // Predicated region
      $region13: #{tpu_custom_call.1} parent=9 // pred_check
        _
      $region14: #{tpu_custom_call.1} parent=9 // pred_check_branch
        %32 = sbr.rel target = $region16
      $region15: #{tpu_custom_call.1} parent=9 // pred_region
        // Predicated region
        $region28: #{tpu_custom_call.1} parent=15 // pred_check
          _
        $region29: #{tpu_custom_call.1} parent=15 // pred_check_branch
          %48 = sbr.rel (0) target = $region31
        $region30: #{tpu_custom_call.1} parent=15 // pred_region
          %s50 = ssub.s32 2, 1
          loop: start=0, step=1, limit=1
          $region32: #{tpu_custom_call.1} parent=30 // loop_pre_header
            _
          $region33: #{tpu_custom_call.1} parent=30 // loop_header
            %s52 = sphi 0, %s56
            %p53 = scmp.ge.s32.totalorder %s52, 1
            %s57 = sphi %s29, %s29
            %s58 = sphi %s30, %s30
          $region34: #{tpu_custom_call.1} parent=30 // loop_header_branch
            %55 = sbr.rel (%p53) target = $region38
          $region35: #{tpu_custom_call.1} parent=30 // loop_body
            %v59 = vld [vmem:[%s57] sm:%s50]
            %60 = vst [vmem:[%s58] sm:%s50] %v59
          $region36: #{tpu_custom_call.1} parent=30 // loop_footer
            %s56 = sadd.s32 1, %s52
          $region37: #{tpu_custom_call.1} parent=30 // loop_footer_branch
            %51 = sbr.rel target = $region33
          $region38: #{tpu_custom_call.1} parent=30 // loop_exit
            _
        $region31: #{tpu_custom_call.1} parent=15 // pred_fallthru
          _
      $region16: #{tpu_custom_call.1} parent=9 // pred_fallthru
        _
      // Predicated region
      $region17: #{tpu_custom_call.1} parent=9 // pred_check
        _
      $region18: #{tpu_custom_call.1} parent=9 // pred_check_branch
        %34 = sbr.rel (0) target = $region20
      $region19: #{tpu_custom_call.1} parent=9 // pred_region
        %s36 = ssub.s32 2, 1
        loop: start=0, step=1, limit=1
        $region21: #{tpu_custom_call.1} parent=19 // loop_pre_header
          _
        $region22: #{tpu_custom_call.1} parent=19 // loop_header
          %s38 = sphi 0, %s42
          %p39 = scmp.ge.s32.totalorder %s38, 1
          %s43 = sphi %s29, %s29
          %s44 = sphi %s30, %s30
        $region23: #{tpu_custom_call.1} parent=19 // loop_header_branch
          %41 = sbr.rel (%p39) target = $region27
        $region24: #{tpu_custom_call.1} parent=19 // loop_body
          %v45 = vld [vmem:[%s43] sm:%s36]
          %46 = vst [vmem:[%s44] sm:%s36] %v45
        $region25: #{tpu_custom_call.1} parent=19 // loop_footer
          %s42 = sadd.s32 1, %s38
        $region26: #{tpu_custom_call.1} parent=19 // loop_footer_branch
          %37 = sbr.rel target = $region22
        $region27: #{tpu_custom_call.1} parent=19 // loop_exit
          _
      $region20: #{tpu_custom_call.1} parent=9 // pred_fallthru
        _
      // Predicated region
      $region39: #{tpu_custom_call.1} parent=9 // pred_check
        _
      $region40: #{tpu_custom_call.1} parent=9 // pred_check_branch
        %63 = sbr.rel (0) target = $region42
      $region41: #{tpu_custom_call.1} parent=9 // pred_region
        %64 = vsyncadd [#allocation3], 16
      $region42: #{tpu_custom_call.1} parent=9 // pred_fallthru
        _
    $region10: #{tpu_custom_call.1} parent=1 // loop_footer
      %s26 = sadd.s32 1, %s22
    $region11: #{tpu_custom_call.1} parent=1 // loop_footer_branch
      %21 = sbr.rel target = $region7
    $region12: #{tpu_custom_call.1} parent=1 // loop_exit
      _
    loop: start=0, step=1, limit=128
    $region43: #{tpu_custom_call.1} parent=1 // loop_pre_header
      _
    $region44: #{tpu_custom_call.1} parent=1 // loop_header
      %s66 = sphi 0, %s70
      %p67 = scmp.ge.s32.totalorder %s66, 128
    $region45: #{tpu_custom_call.1} parent=1 // loop_header_branch
      %69 = sbr.rel (%p67) target = $region49
    $region46: #{tpu_custom_call.1} parent=1 // loop_body
      %72 = dma.done [#allocation3], 16
    $region47: #{tpu_custom_call.1} parent=1 // loop_footer
      %s70 = sadd.s32 1, %s66
    $region48: #{tpu_custom_call.1} parent=1 // loop_footer_branch
      %65 = sbr.rel target = $region44
    $region49: #{tpu_custom_call.1} parent=1 // loop_exit
      _
    %v73 = vld [vmem:[#allocation2] sm:$0xff]
    %v74 = vld [vmem:[#allocation2 + $0x8] sm:$0xff]
    %v75 = vld [vmem:[#allocation2 + $0x10] sm:$0xff]
    %v76 = vld [vmem:[#allocation2 + $0x18] sm:$0xff]
    %v77 = vld [vmem:[#allocation2 + $0x20] sm:$0xff]
    %v78 = vld [vmem:[#allocation2 + $0x28] sm:$0xff]
    %v79 = vld [vmem:[#allocation2 + $0x30] sm:$0xff]
    %v80 = vld [vmem:[#allocation2 + $0x38] sm:$0xff]
    %v81 = vld [vmem:[#allocation2 + $0x40] sm:$0xff]
    %v82 = vld [vmem:[#allocation2 + $0x48] sm:$0xff]
    %v83 = vld [vmem:[#allocation2 + $0x50] sm:$0xff]
    %v84 = vld [vmem:[#allocation2 + $0x58] sm:$0xff]
    %v85 = vld [vmem:[#allocation2 + $0x60] sm:$0xff]
    %v86 = vld [vmem:[#allocation2 + $0x68] sm:$0xff]
    %v87 = vld [vmem:[#allocation2 + $0x70] sm:$0xff]
    %v88 = vld [vmem:[#allocation2 + $0x78] sm:$0xff]
    %v89 = vpack.c.bf16 %v74, %v73
    %v90 = vpack.c.bf16 %v76, %v75
    %v91 = vpack.c.bf16 %v78, %v77
    %v92 = vpack.c.bf16 %v80, %v79
    %v93 = vpack.c.bf16 %v82, %v81
    %v94 = vpack.c.bf16 %v84, %v83
    %v95 = vpack.c.bf16 %v86, %v85
    %v96 = vpack.c.bf16 %v88, %v87
    %v97 = vld [vmem:[%s2] sm:$0xf]
    %v98 = vld [vmem:[%s2 + $0x4] sm:$0xf]
    %v101 = vunpack.c.l.b16 %v97
    %v102 = vunpack.c.l.b16 %v98
    %v103 = vpack.c.b16 %v102, %v101
    %vm105 = vcmask 130048
    %v107 = vsel %vm105, %v89, 0
    %v110 = vsel %vm105, %v90, 0
    %v113 = vsel %vm105, %v91, 0
    %v116 = vsel %vm105, %v92, 0
    %v119 = vsel %vm105, %v93, 0
    %v122 = vsel %vm105, %v94, 0
    %v125 = vsel %vm105, %v95, 0
    %v128 = vsel %vm105, %v96, 0
    %130 = vmatpush.bf16.msra.mxu0 0
    %131 = vmatpush.bf16.msra.mxu0 0
    %132 = vmatpush.bf16.msra.mxu0 0
    %133 = vmatpush.bf16.msra.mxu0 0
    %134 = vmatpush.bf16.msra.mxu0 0
    %135 = vmatpush.bf16.msra.mxu0 0
    %136 = vmatpush.bf16.msra.mxu0 0
    %137 = vmatpush.bf16.msra.mxu0 %v103
    %138 = vmatmul.bf16.gmra.mxu0 %v107
    %v139 = vpop.f32.mrf.mxu0
    %v140 = vadd.f32 0.0, %v139
    %v141 = vpop.f32.mrf.mxu0
    %v142 = vadd.f32 0.0, %v141
    %143 = vmatmul.bf16.gmra.mxu0 %v110
    %v144 = vpop.f32.mrf.mxu0
    %v145 = vadd.f32 0.0, %v144
    %v146 = vpop.f32.mrf.mxu0
    %v147 = vadd.f32 0.0, %v146
    %148 = vmatmul.bf16.gmra.mxu0 %v113
    %v149 = vpop.f32.mrf.mxu0
    %v150 = vadd.f32 0.0, %v149
    %v151 = vpop.f32.mrf.mxu0
    %v152 = vadd.f32 0.0, %v151
    %153 = vmatmul.bf16.gmra.mxu0 %v116
    %v154 = vpop.f32.mrf.mxu0
    %v155 = vadd.f32 0.0, %v154
    %v156 = vpop.f32.mrf.mxu0
    %v157 = vadd.f32 0.0, %v156
    %158 = vmatmul.bf16.gmra.mxu0 %v119
    %v159 = vpop.f32.mrf.mxu0
    %v160 = vadd.f32 0.0, %v159
    %v161 = vpop.f32.mrf.mxu0
    %v162 = vadd.f32 0.0, %v161
    %163 = vmatmul.bf16.gmra.mxu0 %v122
    %v164 = vpop.f32.mrf.mxu0
    %v165 = vadd.f32 0.0, %v164
    %v166 = vpop.f32.mrf.mxu0
    %v167 = vadd.f32 0.0, %v166
    %168 = vmatmul.bf16.gmra.mxu0 %v125
    %v169 = vpop.f32.mrf.mxu0
    %v170 = vadd.f32 0.0, %v169
    %v171 = vpop.f32.mrf.mxu0
    %v172 = vadd.f32 0.0, %v171
    %173 = vmatmul.bf16.gmra.mxu0 %v128
    %v174 = vpop.f32.mrf.mxu0
    %v175 = vadd.f32 0.0, %v174
    %v176 = vpop.f32.mrf.mxu0
    %v177 = vadd.f32 0.0, %v176
    %178 = vdwg.mxu0
    %179 = vst [vmem:[#allocation6] sm:$0xff] %v140
    %180 = vst [vmem:[#allocation6 + $0x8] sm:$0xff] %v142
    %181 = vst [vmem:[#allocation6 + $0x10] sm:$0xff] %v145
    %182 = vst [vmem:[#allocation6 + $0x18] sm:$0xff] %v147
    %183 = vst [vmem:[#allocation6 + $0x20] sm:$0xff] %v150
    %184 = vst [vmem:[#allocation6 + $0x28] sm:$0xff] %v152
    %185 = vst [vmem:[#allocation6 + $0x30] sm:$0xff] %v155
    %186 = vst [vmem:[#allocation6 + $0x38] sm:$0xff] %v157
    %187 = vst [vmem:[#allocation6 + $0x40] sm:$0xff] %v160
    %188 = vst [vmem:[#allocation6 + $0x48] sm:$0xff] %v162
    %189 = vst [vmem:[#allocation6 + $0x50] sm:$0xff] %v165
    %190 = vst [vmem:[#allocation6 + $0x58] sm:$0xff] %v167
    %191 = vst [vmem:[#allocation6 + $0x60] sm:$0xff] %v170
    %192 = vst [vmem:[#allocation6 + $0x68] sm:$0xff] %v172
    %193 = vst [vmem:[#allocation6 + $0x70] sm:$0xff] %v175
    %194 = vst [vmem:[#allocation6 + $0x78] sm:$0xff] %v177
    // Predicated region
    $region50: #{tpu_custom_call.1} parent=1 // pred_check
      _
    $region51: #{tpu_custom_call.1} parent=1 // pred_check_branch
      %196 = sbr.rel (0) target = $region53
    $region52: #{tpu_custom_call.1} parent=1 // pred_region
      %198 = vsyncadd [#allocation7], 0
      %s199 = sshll.u32 [#allocation6], 4
      %s200 = int_to_ptr.vmem [resolvable:$true] %s199
      %s201 = sshll.u32 %s3, 4
      %s202 = int_to_ptr.hbm [resolvable:$true] %s201
      %207 = dma.vmem_to_hbm [thread:$0]  %s200, 2048, %s202, [#allocation7], 128, 128, 8
    $region53: #{tpu_custom_call.1} parent=1 // pred_fallthru
      _
    // Predicated region
    $region54: #{tpu_custom_call.1} parent=1 // pred_check
      _
    $region55: #{tpu_custom_call.1} parent=1 // pred_check_branch
      %209 = sbr.rel (0) target = $region57
    $region56: #{tpu_custom_call.1} parent=1 // pred_region
      %211 = dma.done [#allocation7], 2048
    $region57: #{tpu_custom_call.1} parent=1 // pred_fallthru
      _
    %212 = vsyncpa [#allocation7], 1
  %213 = vsyncmov [#allocation3]
  %s214 = vpop.sfrf %213
  %p215 = scmp.eq.s32.totalorder %s214, 0
  %p216 = pneg %p215
  %218 = shalt.err (%p216)

</llo_original>
